<compile_context>
chip_gen: v7x
topology: tpu7x:2x2x1
jax: 0.10.0
libtpu: 0.0.40
codegen_flags: <defaults>
</compile_context>

<pallas_src>
import jax
import jax.numpy as jnp
from jax.experimental import pallas as pl
from jax.experimental.pallas import tpu as pltpu


def _round_up(n, m):
    return ((n + m - 1) // m) * m


def actor_kernel(x_ref, w1_ref, w2_ref, w3_ref, o_ref):
    s = x_ref.shape[1]            # nb_states (fc1 contraction dim)
    k1 = w1_ref.shape[0] - 16     # 16-aligned bias-row offset of fc1
    k2 = w2_ref.shape[0] - 16     # padded hidden1 (multiple of 128)
    k3 = w3_ref.shape[0] - 16     # padded hidden2 (multiple of 128)

    # fc1 + ReLU: bf16 x bf16 on the MXU, f32 accumulate, f32 elementwise.
    x = x_ref[...].astype(jnp.bfloat16)
    h1 = jnp.dot(x, w1_ref[:s, :], preferred_element_type=jnp.float32)
    h1 = jnp.maximum(h1 + w1_ref[k1:k1 + 1, :].astype(jnp.float32), 0.0)

    # fc2 + ReLU
    h2 = jnp.dot(h1.astype(jnp.bfloat16), w2_ref[:k2, :],
                 preferred_element_type=jnp.float32)
    h2 = jnp.maximum(h2 + w2_ref[k2:k2 + 1, :].astype(jnp.float32), 0.0)

    # fc3 + sigmoid (exact, single EUP tanh): sigmoid(z) = 0.5*tanh(z/2)+0.5
    h3 = jnp.dot(h2.astype(jnp.bfloat16), w3_ref[:k3, :],
                 preferred_element_type=jnp.float32)
    h3 = h3 + w3_ref[k3:k3 + 1, :].astype(jnp.float32)
    o_ref[...] = (0.5 * jnp.tanh(0.5 * h3) + 0.5).astype(o_ref.dtype)


def actor_forward(x, params, *, max_batch_tile=512):
    """x: (batch, nb_states) f32.  params: packed (w1a, w2a, w3a) bf16.
    Returns (batch, nb_actions) f32."""
    w1a, w2a, w3a = params
    b, s = x.shape
    a = w3a.shape[1]

    # Batch tile selection:
    #   * b < 8   : a single exact block (block == full array dims).
    #   * b >= 16 : at least two grid steps so v7x can shard rows across both
    #               TensorCores; capped at max_batch_tile (512 by default) so
    #               single-TC v5e/v6e amortize per-step overhead with big tiles.
    # No host-side padding: Pallas handles the partial boundary block (garbage
    # rows feed only output rows that are never written back).
    if b >= 16:
        tb = min(max_batch_tile, _round_up(pl.cdiv(b, 2), 8))
    elif b >= 8:
        tb = 8
    else:
        tb = b
    grid_b = pl.cdiv(b, tb)

    return pl.pallas_call(
        actor_kernel,
        out_shape=jax.ShapeDtypeStruct((b, a), jnp.float32),
        grid_spec=pltpu.PrefetchScalarGridSpec(
            num_scalar_prefetch=0,
            grid=(grid_b,),
            in_specs=[
                pl.BlockSpec((tb, s), lambda i: (i, 0)),     # activations
                pl.BlockSpec(w1a.shape, lambda i: (0, 0)),   # VMEM-resident weights
                pl.BlockSpec(w2a.shape, lambda i: (0, 0)),   # (constant index_map:
                pl.BlockSpec(w3a.shape, lambda i: (0, 0)),   #  DMA'd once)
            ],
            out_specs=pl.BlockSpec((tb, a), lambda i: (i, 0)),
        ),
        compiler_params=pltpu.CompilerParams(
            dimension_semantics=("parallel",)),
    )(x, w1a, w2a, w3a)


def _pack_linear(key, fan_in, fan_out, k_rows, out_cols, dtype):
    """nn.Linear default init (uniform +/- 1/sqrt(fan_in)) packed as one
    (k_rows + 16, out_cols) matrix:
      rows [0:fan_in)        : W in (in, out) layout (zero-padded columns)
      rows [fan_in:k_rows)   : zeros (inert padded input units)
      row  k_rows            : bias (zero-padded); k_rows is a multiple of 16
                               so this slice stays on a bf16 packed-tile boundary
      rows (k_rows, k_rows+16): zeros (keeps total rows sublane-pack aligned)
    All padding is zero, so padded hidden units are exactly inert."""
    kw, kb = jax.random.split(key)
    bound = 1.0 / (fan_in ** 0.5)
    w = jax.random.uniform(kw, (fan_in, fan_out), jnp.float32, -bound, bound)
    bias = jax.random.uniform(kb, (fan_out,), jnp.float32, -bound, bound)
    packed = jnp.zeros((k_rows + 16, out_cols), jnp.float32)
    packed = packed.at[:fan_in, :fan_out].set(w)
    packed = packed.at[k_rows, :fan_out].set(bias)
    return packed.astype(dtype)


def init_actor_params(key, nb_states, nb_actions, hidden1=400, hidden2=300,
                      weight_dtype=jnp.bfloat16):
    h1p = _round_up(hidden1, 128)     # 400 -> 512 (lane-aligned hidden width)
    h2p = _round_up(hidden2, 128)     # 300 -> 384
    sp = _round_up(nb_states, 16)     # 16-aligned bias-row offset for fc1
    k1, k2, k3 = jax.random.split(key, 3)
    w1a = _pack_linear(k1, nb_states, hidden1, sp, h1p, weight_dtype)
    w2a = _pack_linear(k2, hidden1, hidden2, h1p, h2p, weight_dtype)
    w3a = _pack_linear(k3, hidden2, nb_actions, h2p, nb_actions, weight_dtype)
    return (w1a, w2a, w3a)


def actor_reference(x, params):
    """Pure-JAX reference that mirrors the kernel's arithmetic exactly
    (bf16 weights, bf16 matmul inputs, f32 accumulation/elementwise)."""
    w1a, w2a, w3a = params
    s = x.shape[1]
    k1, k2, k3 = (w.shape[0] - 16 for w in (w1a, w2a, w3a))

    def dense(h, wa, n_w_rows, bias_row):
        z = jnp.dot(h.astype(jnp.bfloat16), wa[:n_w_rows],
                    preferred_element_type=jnp.float32)
        return z + wa[bias_row].astype(jnp.float32)

    h1 = jnp.maximum(dense(x, w1a, s, k1), 0.0)
    h2 = jnp.maximum(dense(h1, w2a, k2, k2), 0.0)
    return jax.nn.sigmoid(dense(h2, w3a, k3, k3))


def actor_reference_f32(x, params):
    """All-f32 reference (module semantics with the bf16-quantized weights)."""
    w1a, w2a, w3a = params
    s = x.shape[1]
    k1, k2, k3 = (w.shape[0] - 16 for w in (w1a, w2a, w3a))
    w1, b1 = w1a[:s].astype(jnp.float32), w1a[k1].astype(jnp.float32)
    w2, b2 = w2a[:k2].astype(jnp.float32), w2a[k2].astype(jnp.float32)
    w3, b3 = w3a[:k3].astype(jnp.float32), w3a[k3].astype(jnp.float32)
    h1 = jnp.maximum(x @ w1 + b1, 0.0)
    h2 = jnp.maximum(h1 @ w2 + b2, 0.0)
    return jax.nn.sigmoid(h2 @ w3 + b3)


if __name__ == "__main__":
    key = jax.random.PRNGKey(0)
    k_params, k_x1, k_x2 = jax.random.split(key, 3)

    nb_states, nb_actions = 32, 8
    params = init_actor_params(k_params, nb_states, nb_actions,
                               hidden1=400, hidden2=300)

    # Small single-block case (the typical DDPG actor call).
    x_small = jax.random.normal(k_x1, (2, nb_states), jnp.float32)
    out_small = jax.block_until_ready(actor_forward(x_small, params))
    assert out_small.shape == (2, nb_actions)
    err_q = float(jnp.max(jnp.abs(out_small - actor_reference(x_small, params))))
    assert err_q < 1e-3, err_q
    err_f = float(jnp.max(jnp.abs(out_small - actor_reference_f32(x_small, params))))
    assert err_f < 2.5e-2, err_f

    # Multi-grid-step case (>=2 parallel steps so v7x uses both TensorCores)
    # with a non-dividing batch to exercise the no-host-pad boundary block.
    x_big = jax.random.normal(k_x2, (24, nb_states), jnp.float32)
    out_big = jax.block_until_ready(actor_forward(x_big, params))
    assert out_big.shape == (24, nb_actions)
    err_qb = float(jnp.max(jnp.abs(out_big - actor_reference(x_big, params))))
    assert err_qb < 1e-3, err_qb

    print("KERNEL_OK")
</pallas_src>

<mosaic_0001>
module attributes {stable_mosaic.version = 11 : i64} {
  func.func @actor_kernel(%arg0: i32, %arg1: memref<2x32xf32, #tpu.memory_space<vmem>>, %arg2: memref<48x512xbf16, #tpu.memory_space<vmem>>, %arg3: memref<528x384xbf16, #tpu.memory_space<vmem>>, %arg4: memref<400x8xbf16, #tpu.memory_space<vmem>>, %arg5: memref<2x8xf32, #tpu.memory_space<vmem>>) attributes {dimension_semantics = [#tpu.dimension_semantics<parallel>], iteration_bounds = array<i64: 1>, scalar_prefetch = 0 : i64, scratch_operands = 0 : i64, tpu.core_type = #tpu.core_type<tc>, window_params = [{transform_indices = @transform_0, window_bounds = array<i64: 2, 32>}, {pipeline_mode = #tpu.pipeline_mode<synchronous>, transform_indices = @transform_1, window_bounds = array<i64: 48, 512>}, {pipeline_mode = #tpu.pipeline_mode<synchronous>, transform_indices = @transform_2, window_bounds = array<i64: 528, 384>}, {pipeline_mode = #tpu.pipeline_mode<synchronous>, transform_indices = @transform_3, window_bounds = array<i64: 400, 8>}, {transform_indices = @transform_4, window_bounds = array<i64: 2, 8>}]} {
    %c0 = arith.constant 0 : index
    %c0_0 = arith.constant 0 : index
    %0 = vector.load %arg1[%c0, %c0_0] : memref<2x32xf32, #tpu.memory_space<vmem>>, vector<2x32xf32>
    %1 = arith.truncf %0 : vector<2x32xf32> to vector<2x32xbf16>
    %c0_1 = arith.constant 0 : index
    %c0_2 = arith.constant 0 : index
    %2 = vector.load %arg2[%c0_1, %c0_2] : memref<48x512xbf16, #tpu.memory_space<vmem>>, vector<32x512xbf16>
    %cst = arith.constant dense<0.000000e+00> : vector<2x512xf32>
    %3 = tpu.matmul %1, %2, %cst {dimension_numbers = #tpu.dot_dimension_numbers<[1], [0], [0], [1], [0, 0, 1, 1], [], []>} : vector<2x32xbf16>, vector<32x512xbf16>, vector<2x512xf32> -> vector<2x512xf32>
    %c32 = arith.constant 32 : index
    %c0_3 = arith.constant 0 : index
    %4 = vector.load %arg2[%c32, %c0_3] : memref<48x512xbf16, #tpu.memory_space<vmem>>, vector<1x512xbf16>
    %5 = arith.extf %4 : vector<1x512xbf16> to vector<1x512xf32>
    %6 = vector.broadcast %5 : vector<1x512xf32> to vector<2x512xf32>
    %7 = arith.addf %3, %6 : vector<2x512xf32>
    %cst_4 = arith.constant 0.000000e+00 : f32
    %8 = vector.broadcast %cst_4 : f32 to vector<2x512xf32>
    %9 = arith.maximumf %7, %8 : vector<2x512xf32>
    %10 = arith.truncf %9 : vector<2x512xf32> to vector<2x512xbf16>
    %c0_5 = arith.constant 0 : index
    %c0_6 = arith.constant 0 : index
    %11 = vector.load %arg3[%c0_5, %c0_6] : memref<528x384xbf16, #tpu.memory_space<vmem>>, vector<512x384xbf16>
    %cst_7 = arith.constant dense<0.000000e+00> : vector<2x384xf32>
    %12 = tpu.matmul %10, %11, %cst_7 {dimension_numbers = #tpu.dot_dimension_numbers<[1], [0], [0], [1], [0, 0, 1, 1], [], []>} : vector<2x512xbf16>, vector<512x384xbf16>, vector<2x384xf32> -> vector<2x384xf32>
    %c512 = arith.constant 512 : index
    %c0_8 = arith.constant 0 : index
    %13 = vector.load %arg3[%c512, %c0_8] : memref<528x384xbf16, #tpu.memory_space<vmem>>, vector<1x384xbf16>
    %14 = arith.extf %13 : vector<1x384xbf16> to vector<1x384xf32>
    %15 = vector.broadcast %14 : vector<1x384xf32> to vector<2x384xf32>
    %16 = arith.addf %12, %15 : vector<2x384xf32>
    %cst_9 = arith.constant 0.000000e+00 : f32
    %17 = vector.broadcast %cst_9 : f32 to vector<2x384xf32>
    %18 = arith.maximumf %16, %17 : vector<2x384xf32>
    %19 = arith.truncf %18 : vector<2x384xf32> to vector<2x384xbf16>
    %c0_10 = arith.constant 0 : index
    %c0_11 = arith.constant 0 : index
    %20 = vector.load %arg4[%c0_10, %c0_11] : memref<400x8xbf16, #tpu.memory_space<vmem>>, vector<384x8xbf16>
    %cst_12 = arith.constant dense<0.000000e+00> : vector<2x8xf32>
    %21 = tpu.matmul %19, %20, %cst_12 {dimension_numbers = #tpu.dot_dimension_numbers<[1], [0], [0], [1], [0, 0, 1, 1], [], []>} : vector<2x384xbf16>, vector<384x8xbf16>, vector<2x8xf32> -> vector<2x8xf32>
    %c384 = arith.constant 384 : index
    %c0_13 = arith.constant 0 : index
    %22 = vector.load %arg4[%c384, %c0_13] : memref<400x8xbf16, #tpu.memory_space<vmem>>, vector<1x8xbf16>
    %23 = arith.extf %22 : vector<1x8xbf16> to vector<1x8xf32>
    %24 = vector.broadcast %23 : vector<1x8xf32> to vector<2x8xf32>
    %25 = arith.addf %21, %24 : vector<2x8xf32>
    %cst_14 = arith.constant 5.000000e-01 : f32
    %26 = vector.broadcast %cst_14 : f32 to vector<2x8xf32>
    %27 = arith.mulf %26, %25 : vector<2x8xf32>
    %28 = math.tanh %27 : vector<2x8xf32>
    %cst_15 = arith.constant 5.000000e-01 : f32
    %29 = vector.broadcast %cst_15 : f32 to vector<2x8xf32>
    %30 = arith.mulf %29, %28 : vector<2x8xf32>
    %cst_16 = arith.constant 5.000000e-01 : f32
    %31 = vector.broadcast %cst_16 : f32 to vector<2x8xf32>
    %32 = arith.addf %30, %31 : vector<2x8xf32>
    %c0_17 = arith.constant 0 : index
    %c0_18 = arith.constant 0 : index
    %33 = vector.load %arg5[%c0_17, %c0_18] : memref<2x8xf32, #tpu.memory_space<vmem>>, vector<2x8xf32>
    tpu.vector_store %arg5[%c0_17, %c0_18], %32 {strides = array<i32>} : memref<2x8xf32, #tpu.memory_space<vmem>>, vector<2x8xf32>,
    return
  }
  func.func @transform_0(%arg0: i32) -> (i32, i32) {
    %c0_i32 = arith.constant 0 : i32
    %c0_i32_0 = arith.constant 0 : i32
    return %arg0, %c0_i32 : i32, i32
  }
  func.func @transform_1(%arg0: i32) -> (i32, i32) {
    %c0_i32 = arith.constant 0 : i32
    %c0_i32_0 = arith.constant 0 : i32
    %c0_i32_1 = arith.constant 0 : i32
    return %c0_i32, %c0_i32_0 : i32, i32
  }
  func.func @transform_2(%arg0: i32) -> (i32, i32) {
    %c0_i32 = arith.constant 0 : i32
    %c0_i32_0 = arith.constant 0 : i32
    %c0_i32_1 = arith.constant 0 : i32
    return %c0_i32, %c0_i32_0 : i32, i32
  }
  func.func @transform_3(%arg0: i32) -> (i32, i32) {
    %c0_i32 = arith.constant 0 : i32
    %c0_i32_0 = arith.constant 0 : i32
    %c0_i32_1 = arith.constant 0 : i32
    return %c0_i32, %c0_i32_0 : i32, i32
  }
  func.func @transform_4(%arg0: i32) -> (i32, i32) {
    %c0_i32 = arith.constant 0 : i32
    %c0_i32_0 = arith.constant 0 : i32
    return %arg0, %c0_i32 : i32, i32
  }
}

</mosaic_0001>

<llo_original>
// kernel: tpu_custom_call.1
$region0: #{tpu_custom_call.1}
  #allocation0 [shape = 'u32[]', space=smem, size = 0x4, offset = 0x4, fixed_abs, tag = 'smem constant byte address 0x4 - core index']
  #allocation1 [shape = 'u32[144,128]{1,0:T(1,128)}', space=vmem, size = 0x12000, scoped, tag = 'internal scratch']
  %s0 = inlined_call_operand.vmem [shape: f32[2,32], index: 0, kind: input, shape index: {}]
  %s1 = inlined_call_operand.vmem [shape: bf16[48,512], index: 1, kind: input, shape index: {}]
  %s2 = inlined_call_operand.hbm [shape: bf16[528,384], index: 2, kind: input, shape index: {}]
  %s3 = inlined_call_operand.vmem [shape: bf16[400,8], index: 3, kind: input, shape index: {}]
  %s4 = inlined_call_operand.hbm [shape: f32[2,8], index: 4, kind: output, shape index: {}]
  %s5 = sld [smem:[#allocation0]]
  $region30: #{tpu_custom_call.1} parent=0
    _
  %s7 = ssub.s32 1, %s5
  %s8 = scalar_select 0, %s7, %s5
  $region1: #{tpu_custom_call.1} parent=0
    #allocation2 [shape = 'u8[405504]{0}', space=vmem, size = 0x63000, scoped, tag = 'input window, operand 2, single buffered']
    #allocation3 [shape = 's32[1]{0}', space=sflag, size = 0x4, scoped, tag = 'scoped memory for tpu_custom_call.1']
    #allocation4 [shape = 's32[1]{0}', space=sflag, size = 0x4, scoped, tag = 'scoped memory for tpu_custom_call.1']
    #allocation5 [shape = 'u8[1024]{0}', space=vmem, size = 0x400, scoped, tag = 'output window, operand 0, single buffered']
    %9 = vsyncpa [#allocation3], 0
    %10 = vsyncpa [#allocation4], 0
    // Predicated region
    $region2: #{tpu_custom_call.1} parent=1 // pred_check
      _
    $region3: #{tpu_custom_call.1} parent=1 // pred_check_branch
      %12 = sbr.rel (0) target = $region5
    $region4: #{tpu_custom_call.1} parent=1 // pred_region
      _
    $region5: #{tpu_custom_call.1} parent=1 // pred_fallthru
      _
    // Predicated region
    $region6: #{tpu_custom_call.1} parent=1 // pred_check
      _
    $region7: #{tpu_custom_call.1} parent=1 // pred_check_branch
      %14 = sbr.rel (0) target = $region9
    $region8: #{tpu_custom_call.1} parent=1 // pred_region
      _
    $region9: #{tpu_custom_call.1} parent=1 // pred_fallthru
      _
    // Predicated region
    $region10: #{tpu_custom_call.1} parent=1 // pred_check
      _
    $region11: #{tpu_custom_call.1} parent=1 // pred_check_branch
      %16 = sbr.rel (0) target = $region13
    $region12: #{tpu_custom_call.1} parent=1 // pred_region
      %s18 = ssub.s32 12672, 12672
      %19 = vsyncadd [#allocation3], %s18
      %s20 = sshll.u32 [#allocation2], 4
      %s21 = int_to_ptr.vmem [resolvable:$true] %s20
      %26 = dma.hbm_to_vmem [thread:$0]  %s2, 12672, %s21, [#allocation3], 192, 192, 12
    $region13: #{tpu_custom_call.1} parent=1 // pred_fallthru
      _
    // Predicated region
    $region14: #{tpu_custom_call.1} parent=1 // pred_check
      _
    $region15: #{tpu_custom_call.1} parent=1 // pred_check_branch
      %28 = sbr.rel (0) target = $region17
    $region16: #{tpu_custom_call.1} parent=1 // pred_region
      _
    $region17: #{tpu_custom_call.1} parent=1 // pred_fallthru
      _
    // Predicated region
    $region18: #{tpu_custom_call.1} parent=1 // pred_check
      _
    $region19: #{tpu_custom_call.1} parent=1 // pred_check_branch
      %30 = sbr.rel (0) target = $region21
    $region20: #{tpu_custom_call.1} parent=1 // pred_region
      %31 = dma.done [#allocation3], 12672
    $region21: #{tpu_custom_call.1} parent=1 // pred_fallthru
      _
    %v33 = vld [vmem:[%s0] sm:$0x3]
    %v34 = vpack.c.bf16 %v33, %v33
    %v35 = vld [vmem:[%s1] sm:$0xff]
    %v36 = vld [vmem:[%s1 + $0x8] sm:$0xff]
    %v37 = vld [vmem:[%s1 + $0x10] sm:$0xff]
    %v38 = vld [vmem:[%s1 + $0x18] sm:$0xff]
    %v39 = vld [vmem:[%s1 + $0x20] sm:$0xff]
    %v40 = vld [vmem:[%s1 + $0x28] sm:$0xff]
    %v41 = vld [vmem:[%s1 + $0x30] sm:$0xff]
    %v42 = vld [vmem:[%s1 + $0x38] sm:$0xff]
    %v43 = vld [vmem:[%s1 + $0x40] sm:$0x11]
    %v44 = vld [vmem:[%s1 + $0x48] sm:$0x11]
    %v45 = vunpack.c.l.bf16 %v43
    %v46 = vunpack.c.h.bf16 %v43
    %v47 = vunpack.c.l.bf16 %v44
    %v48 = vunpack.c.h.bf16 %v44
    %v49 = vlaneseq
    %v50 = vshrl.u32 %v49, 7
    %v51 = vsub.s32 0, %v50
    %v52 = vrot.slane %v45, %v51
    %v53 = vlaneseq
    %v54 = vshrl.u32 %v53, 7
    %v55 = vsub.s32 0, %v54
    %v56 = vrot.slane %v46, %v55
    %v57 = vlaneseq
    %v58 = vshrl.u32 %v57, 7
    %v59 = vsub.s32 0, %v58
    %v60 = vrot.slane %v47, %v59
    %v61 = vlaneseq
    %v62 = vshrl.u32 %v61, 7
    %v63 = vsub.s32 0, %v62
    %v64 = vrot.slane %v48, %v63
    %v73 = vunpack.c.l.b16 %v35
    %v74 = vunpack.c.h.b16 %v35
    %v75 = vunpack.c.l.b16 %v36
    %v76 = vunpack.c.h.b16 %v36
    %v77 = vunpack.c.l.b16 %v37
    %v78 = vunpack.c.h.b16 %v37
    %v79 = vunpack.c.l.b16 %v38
    %v80 = vunpack.c.h.b16 %v38
    %v81 = vunpack.c.l.b16 %v39
    %v82 = vunpack.c.h.b16 %v39
    %v83 = vunpack.c.l.b16 %v40
    %v84 = vunpack.c.h.b16 %v40
    %v85 = vunpack.c.l.b16 %v41
    %v86 = vunpack.c.h.b16 %v41
    %v87 = vunpack.c.l.b16 %v42
    %v88 = vunpack.c.h.b16 %v42
    %v89 = vpack.c.b16 %v77, %v73
    %v90 = vpack.c.b16 %v78, %v74
    %v91 = vpack.c.b16 %v79, %v75
    %v92 = vpack.c.b16 %v80, %v76
    %v93 = vpack.c.b16 %v85, %v81
    %v94 = vpack.c.b16 %v86, %v82
    %v95 = vpack.c.b16 %v87, %v83
    %v96 = vpack.c.b16 %v88, %v84
    %vm105 = vcmask 261120
    %v107 = vsel %vm105, %v34, 0
    %109 = vmatprep.subr.bf16.mxu0 %v90
    %110 = vmatpush1.bf16.msra.mxu0 %v89
    %111 = vmatprep.subr.bf16.mxu0 %v94
    %112 = vmatpush1.bf16.msra.mxu0 %v93
    %113 = vmatprep.subr.bf16.mxu0 0
    %114 = vmatpush1.bf16.msra.mxu0 0
    %115 = vmatprep.subr.bf16.mxu0 0
    %116 = vmatpush1.bf16.msra.mxu0 0
    %117 = vmatprep.subr.bf16.mxu0 0
    %118 = vmatpush1.bf16.msra.mxu0 0
    %119 = vmatprep.subr.bf16.mxu0 0
    %120 = vmatpush1.bf16.msra.mxu0 0
    %121 = vmatprep.subr.bf16.mxu0 0
    %122 = vmatpush1.bf16.msra.mxu0 0
    %123 = vmatprep.subr.bf16.mxu0 0
    %124 = vmatpush1.bf16.msra.mxu0 0
    %125 = vmatprep.subr.bf16.mxu0 0
    %126 = vmatpush1.bf16.msra.mxu0 0
    %127 = vmatprep.subr.bf16.mxu0 0
    %128 = vmatpush1.bf16.msra.mxu0 0
    %129 = vmatprep.subr.bf16.mxu0 0
    %130 = vmatpush1.bf16.msra.mxu0 0
    %131 = vmatprep.subr.bf16.mxu0 0
    %132 = vmatpush1.bf16.msra.mxu0 0
    %133 = vmatprep.subr.bf16.mxu0 0
    %134 = vmatpush1.bf16.msra.mxu0 0
    %135 = vmatprep.subr.bf16.mxu0 0
    %136 = vmatpush1.bf16.msra.mxu0 0
    %137 = vmatprep.subr.bf16.mxu0 0
    %138 = vmatpush1.bf16.msra.mxu0 0
    %139 = vmatprep.subr.bf16.mxu0 0
    %140 = vmatpush1.bf16.msra.mxu0 0
    %141 = vmatprep.mubr.bf16.mxu0 0
    %142 = vmatmul.mubr.bf16.gmra.mrb[0].mxu0 %v107
    %v143 = vpop.f32.mrb[0].mxu0
    %v144 = vadd.f32 %v52, %v143
    %v145 = vpop.f32.mrb[0].mxu0
    %v146 = vadd.f32 %v56, %v145
    %v147 = vpop.f32.mrb[0].mxu0
    %v148 = vpop.f32.mrb[0].mxu0
    %149 = vdwg.mxu0
    %150 = vmatprep.subr.bf16.mxu0 %v92
    %151 = vmatpush1.bf16.msra.mxu0 %v91
    %152 = vmatprep.subr.bf16.mxu0 %v96
    %153 = vmatpush1.bf16.msra.mxu0 %v95
    %154 = vmatprep.subr.bf16.mxu0 0
    %155 = vmatpush1.bf16.msra.mxu0 0
    %156 = vmatprep.subr.bf16.mxu0 0
    %157 = vmatpush1.bf16.msra.mxu0 0
    %158 = vmatprep.subr.bf16.mxu0 0
    %159 = vmatpush1.bf16.msra.mxu0 0
    %160 = vmatprep.subr.bf16.mxu0 0
    %161 = vmatpush1.bf16.msra.mxu0 0
    %162 = vmatprep.subr.bf16.mxu0 0
    %163 = vmatpush1.bf16.msra.mxu0 0
    %164 = vmatprep.subr.bf16.mxu0 0
    %165 = vmatpush1.bf16.msra.mxu0 0
    %166 = vmatprep.subr.bf16.mxu0 0
    %167 = vmatpush1.bf16.msra.mxu0 0
    %168 = vmatprep.subr.bf16.mxu0 0
    %169 = vmatpush1.bf16.msra.mxu0 0
    %170 = vmatprep.subr.bf16.mxu0 0
    %171 = vmatpush1.bf16.msra.mxu0 0
    %172 = vmatprep.subr.bf16.mxu0 0
    %173 = vmatpush1.bf16.msra.mxu0 0
    %174 = vmatprep.subr.bf16.mxu0 0
    %175 = vmatpush1.bf16.msra.mxu0 0
    %176 = vmatprep.subr.bf16.mxu0 0
    %177 = vmatpush1.bf16.msra.mxu0 0
    %178 = vmatprep.subr.bf16.mxu0 0
    %179 = vmatpush1.bf16.msra.mxu0 0
    %180 = vmatprep.subr.bf16.mxu0 0
    %181 = vmatpush1.bf16.msra.mxu0 0
    %182 = vmatprep.mubr.bf16.mxu0 0
    %183 = vmatmul.mubr.bf16.gmra.mrb[0].mxu0 %v107
    %v184 = vpop.f32.mrb[0].mxu0
    %v185 = vadd.f32 %v60, %v184
    %v186 = vpop.f32.mrb[0].mxu0
    %v187 = vadd.f32 %v64, %v186
    %v188 = vpop.f32.mrb[0].mxu0
    %v189 = vpop.f32.mrb[0].mxu0
    %190 = vdwg.mxu0
    %v191 = vmax.f32 %v144, 0.0
    %v192 = vmax.f32 %v146, 0.0
    %v193 = vmax.f32 %v185, 0.0
    %v194 = vmax.f32 %v187, 0.0
    %v195 = vpack.c.bf16 %v191, %v191
    %v196 = vpack.c.bf16 %v192, %v192
    %v197 = vpack.c.bf16 %v193, %v193
    %v198 = vpack.c.bf16 %v194, %v194
    %v199 = vld [vmem:[#allocation2] sm:$0xff]
    %v200 = vld [vmem:[#allocation2 + $0x8] sm:$0xf]
    %v201 = vld [vmem:[#allocation2 + $0xc] sm:$0xff]
    %v202 = vld [vmem:[#allocation2 + $0x14] sm:$0xf]
    %v203 = vld [vmem:[#allocation2 + $0x18] sm:$0xff]
    %v204 = vld [vmem:[#allocation2 + $0x20] sm:$0xf]
    %v205 = vld [vmem:[#allocation2 + $0x24] sm:$0xff]
    %v206 = vld [vmem:[#allocation2 + $0x2c] sm:$0xf]
    %v207 = vld [vmem:[#allocation2 + $0x30] sm:$0xff]
    %v208 = vld [vmem:[#allocation2 + $0x38] sm:$0xf]
    %v209 = vld [vmem:[#allocation2 + $0x3c] sm:$0xff]
    %v210 = vld [vmem:[#allocation2 + $0x44] sm:$0xf]
    %v211 = vld [vmem:[#allocation2 + $0x48] sm:$0xff]
    %v212 = vld [vmem:[#allocation2 + $0x50] sm:$0xf]
    %v213 = vld [vmem:[#allocation2 + $0x54] sm:$0xff]
    %v214 = vld [vmem:[#allocation2 + $0x5c] sm:$0xf]
    %v215 = vld [vmem:[#allocation2 + $0x60] sm:$0xff]
    %v216 = vld [vmem:[#allocation2 + $0x68] sm:$0xf]
    %v217 = vld [vmem:[#allocation2 + $0x6c] sm:$0xff]
    %v218 = vld [vmem:[#allocation2 + $0x74] sm:$0xf]
    %v219 = vld [vmem:[#allocation2 + $0x78] sm:$0xff]
    %v220 = vld [vmem:[#allocation2 + $0x80] sm:$0xf]
    %v221 = vld [vmem:[#allocation2 + $0x84] sm:$0xff]
    %v222 = vld [vmem:[#allocation2 + $0x8c] sm:$0xf]
    %v223 = vld [vmem:[#allocation2 + $0x90] sm:$0xff]
    %v224 = vld [vmem:[#allocation2 + $0x98] sm:$0xf]
    %v225 = vld [vmem:[#allocation2 + $0x9c] sm:$0xff]
    %v226 = vld [vmem:[#allocation2 + $0xa4] sm:$0xf]
    %v227 = vld [vmem:[#allocation2 + $0xa8] sm:$0xff]
    %v228 = vld [vmem:[#allocation2 + $0xb0] sm:$0xf]
    %v229 = vld [vmem:[#allocation2 + $0xb4] sm:$0xff]
    %v230 = vld [vmem:[#allocation2 + $0xbc] sm:$0xf]
    %v231 = vld [vmem:[#allocation2 + $0xc0] sm:$0xff]
    %v232 = vld [vmem:[#allocation2 + $0xc8] sm:$0xf]
    %v233 = vld [vmem:[#allocation2 + $0xcc] sm:$0xff]
    %v234 = vld [vmem:[#allocation2 + $0xd4] sm:$0xf]
    %v235 = vld [vmem:[#allocation2 + $0xd8] sm:$0xff]
    %v236 = vld [vmem:[#allocation2 + $0xe0] sm:$0xf]
    %v237 = vld [vmem:[#allocation2 + $0xe4] sm:$0xff]
    %v238 = vld [vmem:[#allocation2 + $0xec] sm:$0xf]
    %v239 = vld [vmem:[#allocation2 + $0xf0] sm:$0xff]
    %v240 = vld [vmem:[#allocation2 + $0xf8] sm:$0xf]
    %v241 = vld [vmem:[#allocation2 + $0xfc] sm:$0xff]
    %v242 = vld [vmem:[#allocation2 + $0x104] sm:$0xf]
    %v243 = vld [vmem:[#allocation2 + $0x108] sm:$0xff]
    %v244 = vld [vmem:[#allocation2 + $0x110] sm:$0xf]
    %v245 = vld [vmem:[#allocation2 + $0x114] sm:$0xff]
    %v246 = vld [vmem:[#allocation2 + $0x11c] sm:$0xf]
    %v247 = vld [vmem:[#allocation2 + $0x120] sm:$0xff]
    %v248 = vld [vmem:[#allocation2 + $0x128] sm:$0xf]
    %v249 = vld [vmem:[#allocation2 + $0x12c] sm:$0xff]
    %v250 = vld [vmem:[#allocation2 + $0x134] sm:$0xf]
    %v251 = vld [vmem:[#allocation2 + $0x138] sm:$0xff]
    %v252 = vld [vmem:[#allocation2 + $0x140] sm:$0xf]
    %v253 = vld [vmem:[#allocation2 + $0x144] sm:$0xff]
    %v254 = vld [vmem:[#allocation2 + $0x14c] sm:$0xf]
    %v255 = vld [vmem:[#allocation2 + $0x150] sm:$0xff]
    %v256 = vld [vmem:[#allocation2 + $0x158] sm:$0xf]
    %v257 = vld [vmem:[#allocation2 + $0x15c] sm:$0xff]
    %v258 = vld [vmem:[#allocation2 + $0x164] sm:$0xf]
    %v259 = vld [vmem:[#allocation2 + $0x168] sm:$0xff]
    %v260 = vld [vmem:[#allocation2 + $0x170] sm:$0xf]
    %v261 = vld [vmem:[#allocation2 + $0x174] sm:$0xff]
    %v262 = vld [vmem:[#allocation2 + $0x17c] sm:$0xf]
    %v263 = vld [vmem:[#allocation2 + $0x180] sm:$0xff]
    %v264 = vld [vmem:[#allocation2 + $0x188] sm:$0xf]
    %v265 = vld [vmem:[#allocation2 + $0x18c] sm:$0xff]
    %v266 = vld [vmem:[#allocation2 + $0x194] sm:$0xf]
    %v267 = vld [vmem:[#allocation2 + $0x198] sm:$0xff]
    %v268 = vld [vmem:[#allocation2 + $0x1a0] sm:$0xf]
    %v269 = vld [vmem:[#allocation2 + $0x1a4] sm:$0xff]
    %v270 = vld [vmem:[#allocation2 + $0x1ac] sm:$0xf]
    %v271 = vld [vmem:[#allocation2 + $0x1b0] sm:$0xff]
    %v272 = vld [vmem:[#allocation2 + $0x1b8] sm:$0xf]
    %v273 = vld [vmem:[#allocation2 + $0x1bc] sm:$0xff]
    %v274 = vld [vmem:[#allocation2 + $0x1c4] sm:$0xf]
    %v275 = vld [vmem:[#allocation2 + $0x1c8] sm:$0xff]
    %v276 = vld [vmem:[#allocation2 + $0x1d0] sm:$0xf]
    %v277 = vld [vmem:[#allocation2 + $0x1d4] sm:$0xff]
    %v278 = vld [vmem:[#allocation2 + $0x1dc] sm:$0xf]
    %v279 = vld [vmem:[#allocation2 + $0x1e0] sm:$0xff]
    %v280 = vld [vmem:[#allocation2 + $0x1e8] sm:$0xf]
    %v281 = vld [vmem:[#allocation2 + $0x1ec] sm:$0xff]
    %v282 = vld [vmem:[#allocation2 + $0x1f4] sm:$0xf]
    %v283 = vld [vmem:[#allocation2 + $0x1f8] sm:$0xff]
    %v284 = vld [vmem:[#allocation2 + $0x200] sm:$0xf]
    %v285 = vld [vmem:[#allocation2 + $0x204] sm:$0xff]
    %v286 = vld [vmem:[#allocation2 + $0x20c] sm:$0xf]
    %v287 = vld [vmem:[#allocation2 + $0x210] sm:$0xff]
    %v288 = vld [vmem:[#allocation2 + $0x218] sm:$0xf]
    %v289 = vld [vmem:[#allocation2 + $0x21c] sm:$0xff]
    %v290 = vld [vmem:[#allocation2 + $0x224] sm:$0xf]
    %v291 = vld [vmem:[#allocation2 + $0x228] sm:$0xff]
    %v292 = vld [vmem:[#allocation2 + $0x230] sm:$0xf]
    %v293 = vld [vmem:[#allocation2 + $0x234] sm:$0xff]
    %v294 = vld [vmem:[#allocation2 + $0x23c] sm:$0xf]
    %v295 = vld [vmem:[#allocation2 + $0x240] sm:$0xff]
    %v296 = vld [vmem:[#allocation2 + $0x248] sm:$0xf]
    %v297 = vld [vmem:[#allocation2 + $0x24c] sm:$0xff]
    %v298 = vld [vmem:[#allocation2 + $0x254] sm:$0xf]
    %v299 = vld [vmem:[#allocation2 + $0x258] sm:$0xff]
    %v300 = vld [vmem:[#allocation2 + $0x260] sm:$0xf]
    %v301 = vld [vmem:[#allocation2 + $0x264] sm:$0xff]
    %v302 = vld [vmem:[#allocation2 + $0x26c] sm:$0xf]
    %v303 = vld [vmem:[#allocation2 + $0x270] sm:$0xff]
    %v304 = vld [vmem:[#allocation2 + $0x278] sm:$0xf]
    %v305 = vld [vmem:[#allocation2 + $0x27c] sm:$0xff]
    %v306 = vld [vmem:[#allocation2 + $0x284] sm:$0xf]
    %v307 = vld [vmem:[#allocation2 + $0x288] sm:$0xff]
    %v308 = vld [vmem:[#allocation2 + $0x290] sm:$0xf]
    %v309 = vld [vmem:[#allocation2 + $0x294] sm:$0xff]
    %v310 = vld [vmem:[#allocation2 + $0x29c] sm:$0xf]
    %v311 = vld [vmem:[#allocation2 + $0x2a0] sm:$0xff]
    %v312 = vld [vmem:[#allocation2 + $0x2a8] sm:$0xf]
    %v313 = vld [vmem:[#allocation2 + $0x2ac] sm:$0xff]
    %v314 = vld [vmem:[#allocation2 + $0x2b4] sm:$0xf]
    %v315 = vld [vmem:[#allocation2 + $0x2b8] sm:$0xff]
    %v316 = vld [vmem:[#allocation2 + $0x2c0] sm:$0xf]
    %v317 = vld [vmem:[#allocation2 + $0x2c4] sm:$0xff]
    %v318 = vld [vmem:[#allocation2 + $0x2cc] sm:$0xf]
    %v319 = vld [vmem:[#allocation2 + $0x2d0] sm:$0xff]
    %v320 = vld [vmem:[#allocation2 + $0x2d8] sm:$0xf]
    %v321 = vld [vmem:[#allocation2 + $0x2dc] sm:$0xff]
    %v322 = vld [vmem:[#allocation2 + $0x2e4] sm:$0xf]
    %v323 = vld [vmem:[#allocation2 + $0x2e8] sm:$0xff]
    %v324 = vld [vmem:[#allocation2 + $0x2f0] sm:$0xf]
    %v325 = vld [vmem:[#allocation2 + $0x2f4] sm:$0xff]
    %v326 = vld [vmem:[#allocation2 + $0x2fc] sm:$0xf]
    %v327 = vld [vmem:[#allocation2 + $0x300] sm:$0x11]
    %v328 = vld [vmem:[#allocation2 + $0x308] sm:$0x1]
    %v329 = vunpack.c.l.bf16 %v327
    %v330 = vunpack.c.h.bf16 %v327
    %v331 = vunpack.c.l.bf16 %v328
    %v332 = vlaneseq
    %v333 = vshrl.u32 %v332, 7
    %v334 = vsub.s32 0, %v333
    %v335 = vrot.slane %v329, %v334
    %v336 = vlaneseq
    %v337 = vshrl.u32 %v336, 7
    %v338 = vsub.s32 0, %v337
    %v339 = vrot.slane %v330, %v338
    %v340 = vlaneseq
    %v341 = vshrl.u32 %v340, 7
    %v342 = vsub.s32 0, %v341
    %v343 = vrot.slane %v331, %v342
    %v472 = vunpack.c.l.b16 %v199
    %v473 = vunpack.c.h.b16 %v199
    %v474 = vunpack.c.l.b16 %v200
    %v475 = vunpack.c.l.b16 %v201
    %v476 = vunpack.c.h.b16 %v201
    %v477 = vunpack.c.l.b16 %v202
    %v478 = vunpack.c.l.b16 %v203
    %v479 = vunpack.c.h.b16 %v203
    %v480 = vunpack.c.l.b16 %v204
    %v481 = vunpack.c.l.b16 %v205
    %v482 = vunpack.c.h.b16 %v205
    %v483 = vunpack.c.l.b16 %v206
    %v484 = vunpack.c.l.b16 %v207
    %v485 = vunpack.c.h.b16 %v207
    %v486 = vunpack.c.l.b16 %v208
    %v487 = vunpack.c.l.b16 %v209
    %v488 = vunpack.c.h.b16 %v209
    %v489 = vunpack.c.l.b16 %v210
    %v490 = vunpack.c.l.b16 %v211
    %v491 = vunpack.c.h.b16 %v211
    %v492 = vunpack.c.l.b16 %v212
    %v493 = vunpack.c.l.b16 %v213
    %v494 = vunpack.c.h.b16 %v213
    %v495 = vunpack.c.l.b16 %v214
    %v496 = vunpack.c.l.b16 %v215
    %v497 = vunpack.c.h.b16 %v215
    %v498 = vunpack.c.l.b16 %v216
    %v499 = vunpack.c.l.b16 %v217
    %v500 = vunpack.c.h.b16 %v217
    %v501 = vunpack.c.l.b16 %v218
    %v502 = vunpack.c.l.b16 %v219
    %v503 = vunpack.c.h.b16 %v219
    %v504 = vunpack.c.l.b16 %v220
    %v505 = vunpack.c.l.b16 %v221
    %v506 = vunpack.c.h.b16 %v221
    %v507 = vunpack.c.l.b16 %v222
    %v508 = vunpack.c.l.b16 %v223
    %v509 = vunpack.c.h.b16 %v223
    %v510 = vunpack.c.l.b16 %v224
    %v511 = vunpack.c.l.b16 %v225
    %v512 = vunpack.c.h.b16 %v225
    %v513 = vunpack.c.l.b16 %v226
    %v514 = vunpack.c.l.b16 %v227
    %v515 = vunpack.c.h.b16 %v227
    %v516 = vunpack.c.l.b16 %v228
    %v517 = vunpack.c.l.b16 %v229
    %v518 = vunpack.c.h.b16 %v229
    %v519 = vunpack.c.l.b16 %v230
    %v520 = vunpack.c.l.b16 %v231
    %v521 = vunpack.c.h.b16 %v231
    %v522 = vunpack.c.l.b16 %v232
    %v523 = vunpack.c.l.b16 %v233
    %v524 = vunpack.c.h.b16 %v233
    %v525 = vunpack.c.l.b16 %v234
    %v526 = vunpack.c.l.b16 %v235
    %v527 = vunpack.c.h.b16 %v235
    %v528 = vunpack.c.l.b16 %v236
    %v529 = vunpack.c.l.b16 %v237
    %v530 = vunpack.c.h.b16 %v237
    %v531 = vunpack.c.l.b16 %v238
    %v532 = vunpack.c.l.b16 %v239
    %v533 = vunpack.c.h.b16 %v239
    %v534 = vunpack.c.l.b16 %v240
    %v535 = vunpack.c.l.b16 %v241
    %v536 = vunpack.c.h.b16 %v241
    %v537 = vunpack.c.l.b16 %v242
    %v538 = vunpack.c.l.b16 %v243
    %v539 = vunpack.c.h.b16 %v243
    %v540 = vunpack.c.l.b16 %v244
    %v541 = vunpack.c.l.b16 %v245
    %v542 = vunpack.c.h.b16 %v245
    %v543 = vunpack.c.l.b16 %v246
    %v544 = vunpack.c.l.b16 %v247
    %v545 = vunpack.c.h.b16 %v247
    %v546 = vunpack.c.l.b16 %v248
    %v547 = vunpack.c.l.b16 %v249
    %v548 = vunpack.c.h.b16 %v249
    %v549 = vunpack.c.l.b16 %v250
    %v550 = vunpack.c.l.b16 %v251
    %v551 = vunpack.c.h.b16 %v251
    %v552 = vunpack.c.l.b16 %v252
    %v553 = vunpack.c.l.b16 %v253
    %v554 = vunpack.c.h.b16 %v253
    %v555 = vunpack.c.l.b16 %v254
    %v556 = vunpack.c.l.b16 %v255
    %v557 = vunpack.c.h.b16 %v255
    %v558 = vunpack.c.l.b16 %v256
    %v559 = vunpack.c.l.b16 %v257
    %v560 = vunpack.c.h.b16 %v257
    %v561 = vunpack.c.l.b16 %v258
    %v562 = vunpack.c.l.b16 %v259
    %v563 = vunpack.c.h.b16 %v259
    %v564 = vunpack.c.l.b16 %v260
    %v565 = vunpack.c.l.b16 %v261
    %v566 = vunpack.c.h.b16 %v261
    %v567 = vunpack.c.l.b16 %v262
    %v568 = vunpack.c.l.b16 %v263
    %v569 = vunpack.c.h.b16 %v263
    %v570 = vunpack.c.l.b16 %v264
    %v571 = vunpack.c.l.b16 %v265
    %v572 = vunpack.c.h.b16 %v265
    %v573 = vunpack.c.l.b16 %v266
    %v574 = vunpack.c.l.b16 %v267
    %v575 = vunpack.c.h.b16 %v267
    %v576 = vunpack.c.l.b16 %v268
    %v577 = vunpack.c.l.b16 %v269
    %v578 = vunpack.c.h.b16 %v269
    %v579 = vunpack.c.l.b16 %v270
    %v580 = vunpack.c.l.b16 %v271
    %v581 = vunpack.c.h.b16 %v271
    %v582 = vunpack.c.l.b16 %v272
    %v583 = vunpack.c.l.b16 %v273
    %v584 = vunpack.c.h.b16 %v273
    %v585 = vunpack.c.l.b16 %v274
    %v586 = vunpack.c.l.b16 %v275
    %v587 = vunpack.c.h.b16 %v275
    %v588 = vunpack.c.l.b16 %v276
    %v589 = vunpack.c.l.b16 %v277
    %v590 = vunpack.c.h.b16 %v277
    %v591 = vunpack.c.l.b16 %v278
    %v592 = vunpack.c.l.b16 %v279
    %v593 = vunpack.c.h.b16 %v279
    %v594 = vunpack.c.l.b16 %v280
    %v595 = vunpack.c.l.b16 %v281
    %v596 = vunpack.c.h.b16 %v281
    %v597 = vunpack.c.l.b16 %v282
    %v598 = vunpack.c.l.b16 %v283
    %v599 = vunpack.c.h.b16 %v283
    %v600 = vunpack.c.l.b16 %v284
    %v601 = vunpack.c.l.b16 %v285
    %v602 = vunpack.c.h.b16 %v285
    %v603 = vunpack.c.l.b16 %v286
    %v604 = vunpack.c.l.b16 %v287
    %v605 = vunpack.c.h.b16 %v287
    %v606 = vunpack.c.l.b16 %v288
    %v607 = vunpack.c.l.b16 %v289
    %v608 = vunpack.c.h.b16 %v289
    %v609 = vunpack.c.l.b16 %v290
    %v610 = vunpack.c.l.b16 %v291
    %v611 = vunpack.c.h.b16 %v291
    %v612 = vunpack.c.l.b16 %v292
    %v613 = vunpack.c.l.b16 %v293
    %v614 = vunpack.c.h.b16 %v293
    %v615 = vunpack.c.l.b16 %v294
    %v616 = vunpack.c.l.b16 %v295
    %v617 = vunpack.c.h.b16 %v295
    %v618 = vunpack.c.l.b16 %v296
    %v619 = vunpack.c.l.b16 %v297
    %v620 = vunpack.c.h.b16 %v297
    %v621 = vunpack.c.l.b16 %v298
    %v622 = vunpack.c.l.b16 %v299
    %v623 = vunpack.c.h.b16 %v299
    %v624 = vunpack.c.l.b16 %v300
    %v625 = vunpack.c.l.b16 %v301
    %v626 = vunpack.c.h.b16 %v301
    %v627 = vunpack.c.l.b16 %v302
    %v628 = vunpack.c.l.b16 %v303
    %v629 = vunpack.c.h.b16 %v303
    %v630 = vunpack.c.l.b16 %v304
    %v631 = vunpack.c.l.b16 %v305
    %v632 = vunpack.c.h.b16 %v305
    %v633 = vunpack.c.l.b16 %v306
    %v634 = vunpack.c.l.b16 %v307
    %v635 = vunpack.c.h.b16 %v307
    %v636 = vunpack.c.l.b16 %v308
    %v637 = vunpack.c.l.b16 %v309
    %v638 = vunpack.c.h.b16 %v309
    %v639 = vunpack.c.l.b16 %v310
    %v640 = vunpack.c.l.b16 %v311
    %v641 = vunpack.c.h.b16 %v311
    %v642 = vunpack.c.l.b16 %v312
    %v643 = vunpack.c.l.b16 %v313
    %v644 = vunpack.c.h.b16 %v313
    %v645 = vunpack.c.l.b16 %v314
    %v646 = vunpack.c.l.b16 %v315
    %v647 = vunpack.c.h.b16 %v315
    %v648 = vunpack.c.l.b16 %v316
    %v649 = vunpack.c.l.b16 %v317
    %v650 = vunpack.c.h.b16 %v317
    %v651 = vunpack.c.l.b16 %v318
    %v652 = vunpack.c.l.b16 %v319
    %v653 = vunpack.c.h.b16 %v319
    %v654 = vunpack.c.l.b16 %v320
    %v655 = vunpack.c.l.b16 %v321
    %v656 = vunpack.c.h.b16 %v321
    %v657 = vunpack.c.l.b16 %v322
    %v658 = vunpack.c.l.b16 %v323
    %v659 = vunpack.c.h.b16 %v323
    %v660 = vunpack.c.l.b16 %v324
    %v661 = vunpack.c.l.b16 %v325
    %v662 = vunpack.c.h.b16 %v325
    %v663 = vunpack.c.l.b16 %v326
    %v664 = vpack.c.b16 %v475, %v472
    %v665 = vpack.c.b16 %v476, %v473
    %v666 = vpack.c.b16 %v477, %v474
    %v667 = vpack.c.b16 %v481, %v478
    %v668 = vpack.c.b16 %v482, %v479
    %v669 = vpack.c.b16 %v483, %v480
    %v670 = vpack.c.b16 %v487, %v484
    %v671 = vpack.c.b16 %v488, %v485
    %v672 = vpack.c.b16 %v489, %v486
    %v673 = vpack.c.b16 %v493, %v490
    %v674 = vpack.c.b16 %v494, %v491
    %v675 = vpack.c.b16 %v495, %v492
    %v676 = vpack.c.b16 %v499, %v496
    %v677 = vpack.c.b16 %v500, %v497
    %v678 = vpack.c.b16 %v501, %v498
    %v679 = vpack.c.b16 %v505, %v502
    %v680 = vpack.c.b16 %v506, %v503
    %v681 = vpack.c.b16 %v507, %v504
    %v682 = vpack.c.b16 %v511, %v508
    %v683 = vpack.c.b16 %v512, %v509
    %v684 = vpack.c.b16 %v513, %v510
    %v685 = vpack.c.b16 %v517, %v514
    %v686 = vpack.c.b16 %v518, %v515
    %v687 = vpack.c.b16 %v519, %v516
    %v688 = vpack.c.b16 %v523, %v520
    %v689 = vpack.c.b16 %v524, %v521
    %v690 = vpack.c.b16 %v525, %v522
    %v691 = vpack.c.b16 %v529, %v526
    %v692 = vpack.c.b16 %v530, %v527
    %v693 = vpack.c.b16 %v531, %v528
    %v694 = vpack.c.b16 %v535, %v532
    %v695 = vpack.c.b16 %v536, %v533
    %v696 = vpack.c.b16 %v537, %v534
    %v697 = vpack.c.b16 %v541, %v538
    %v698 = vpack.c.b16 %v542, %v539
    %v699 = vpack.c.b16 %v543, %v540
    %v700 = vpack.c.b16 %v547, %v544
    %v701 = vpack.c.b16 %v548, %v545
    %v702 = vpack.c.b16 %v549, %v546
    %v703 = vpack.c.b16 %v553, %v550
    %v704 = vpack.c.b16 %v554, %v551
    %v705 = vpack.c.b16 %v555, %v552
    %v706 = vpack.c.b16 %v559, %v556
    %v707 = vpack.c.b16 %v560, %v557
    %v708 = vpack.c.b16 %v561, %v558
    %v709 = vpack.c.b16 %v565, %v562
    %v710 = vpack.c.b16 %v566, %v563
    %v711 = vpack.c.b16 %v567, %v564
    %v712 = vpack.c.b16 %v571, %v568
    %v713 = vpack.c.b16 %v572, %v569
    %v714 = vpack.c.b16 %v573, %v570
    %v715 = vpack.c.b16 %v577, %v574
    %v716 = vpack.c.b16 %v578, %v575
    %v717 = vpack.c.b16 %v579, %v576
    %v718 = vpack.c.b16 %v583, %v580
    %v719 = vpack.c.b16 %v584, %v581
    %v720 = vpack.c.b16 %v585, %v582
    %v721 = vpack.c.b16 %v589, %v586
    %v722 = vpack.c.b16 %v590, %v587
    %v723 = vpack.c.b16 %v591, %v588
    %v724 = vpack.c.b16 %v595, %v592
    %v725 = vpack.c.b16 %v596, %v593
    %v726 = vpack.c.b16 %v597, %v594
    %v727 = vpack.c.b16 %v601, %v598
    %v728 = vpack.c.b16 %v602, %v599
    %v729 = vpack.c.b16 %v603, %v600
    %v730 = vpack.c.b16 %v607, %v604
    %v731 = vpack.c.b16 %v608, %v605
    %v732 = vpack.c.b16 %v609, %v606
    %v733 = vpack.c.b16 %v613, %v610
    %v734 = vpack.c.b16 %v614, %v611
    %v735 = vpack.c.b16 %v615, %v612
    %v736 = vpack.c.b16 %v619, %v616
    %v737 = vpack.c.b16 %v620, %v617
    %v738 = vpack.c.b16 %v621, %v618
    %v739 = vpack.c.b16 %v625, %v622
    %v740 = vpack.c.b16 %v626, %v623
    %v741 = vpack.c.b16 %v627, %v624
    %v742 = vpack.c.b16 %v631, %v628
    %v743 = vpack.c.b16 %v632, %v629
    %v744 = vpack.c.b16 %v633, %v630
    %v745 = vpack.c.b16 %v637, %v634
    %v746 = vpack.c.b16 %v638, %v635
    %v747 = vpack.c.b16 %v639, %v636
    %v748 = vpack.c.b16 %v643, %v640
    %v749 = vpack.c.b16 %v644, %v641
    %v750 = vpack.c.b16 %v645, %v642
    %v751 = vpack.c.b16 %v649, %v646
    %v752 = vpack.c.b16 %v650, %v647
    %v753 = vpack.c.b16 %v651, %v648
    %v754 = vpack.c.b16 %v655, %v652
    %v755 = vpack.c.b16 %v656, %v653
    %v756 = vpack.c.b16 %v657, %v654
    %v757 = vpack.c.b16 %v661, %v658
    %v758 = vpack.c.b16 %v662, %v659
    %v759 = vpack.c.b16 %v663, %v660
    %856 = vmatprep.subr.bf16.mxu0 %v665
    %857 = vmatpush1.bf16.msra.mxu0 %v664
    %858 = vmatprep.subr.bf16.mxu0 %v668
    %859 = vmatpush1.bf16.msra.mxu0 %v667
    %860 = vmatprep.subr.bf16.mxu0 %v671
    %861 = vmatpush1.bf16.msra.mxu0 %v670
    %862 = vmatprep.subr.bf16.mxu0 %v674
    %863 = vmatpush1.bf16.msra.mxu0 %v673
    %864 = vmatprep.subr.bf16.mxu0 %v677
    %865 = vmatpush1.bf16.msra.mxu0 %v676
    %866 = vmatprep.subr.bf16.mxu0 %v680
    %867 = vmatpush1.bf16.msra.mxu0 %v679
    %868 = vmatprep.subr.bf16.mxu0 %v683
    %869 = vmatpush1.bf16.msra.mxu0 %v682
    %870 = vmatprep.subr.bf16.mxu0 %v686
    %871 = vmatpush1.bf16.msra.mxu0 %v685
    %872 = vmatprep.subr.bf16.mxu0 %v689
    %873 = vmatpush1.bf16.msra.mxu0 %v688
    %874 = vmatprep.subr.bf16.mxu0 %v692
    %875 = vmatpush1.bf16.msra.mxu0 %v691
    %876 = vmatprep.subr.bf16.mxu0 %v695
    %877 = vmatpush1.bf16.msra.mxu0 %v694
    %878 = vmatprep.subr.bf16.mxu0 %v698
    %879 = vmatpush1.bf16.msra.mxu0 %v697
    %880 = vmatprep.subr.bf16.mxu0 %v701
    %881 = vmatpush1.bf16.msra.mxu0 %v700
    %882 = vmatprep.subr.bf16.mxu0 %v704
    %883 = vmatpush1.bf16.msra.mxu0 %v703
    %884 = vmatprep.subr.bf16.mxu0 %v707
    %885 = vmatpush1.bf16.msra.mxu0 %v706
    %886 = vmatprep.subr.bf16.mxu0 %v710
    %887 = vmatpush1.bf16.msra.mxu0 %v709
    %888 = vmatprep.mubr.bf16.mxu0 %v196
    %889 = vmatmul.mubr.bf16.gmra.mrb[0].mxu0 %v195
    %v890 = vpop.f32.mrb[0].mxu0
    %v891 = vadd.f32 %v335, %v890
    %v892 = vpop.f32.mrb[0].mxu0
    %v893 = vadd.f32 %v339, %v892
    %v894 = vpop.f32.mrb[0].mxu0
    %v895 = vpop.f32.mrb[0].mxu0
    %896 = vdwg.mxu0
    %897 = vmatprep.subr.bf16.mxu0 %v713
    %898 = vmatpush1.bf16.msra.mxu0 %v712
    %899 = vmatprep.subr.bf16.mxu0 %v716
    %900 = vmatpush1.bf16.msra.mxu0 %v715
    %901 = vmatprep.subr.bf16.mxu0 %v719
    %902 = vmatpush1.bf16.msra.mxu0 %v718
    %903 = vmatprep.subr.bf16.mxu0 %v722
    %904 = vmatpush1.bf16.msra.mxu0 %v721
    %905 = vmatprep.subr.bf16.mxu0 %v725
    %906 = vmatpush1.bf16.msra.mxu0 %v724
    %907 = vmatprep.subr.bf16.mxu0 %v728
    %908 = vmatpush1.bf16.msra.mxu0 %v727
    %909 = vmatprep.subr.bf16.mxu0 %v731
    %910 = vmatpush1.bf16.msra.mxu0 %v730
    %911 = vmatprep.subr.bf16.mxu0 %v734
    %912 = vmatpush1.bf16.msra.mxu0 %v733
    %913 = vmatprep.subr.bf16.mxu0 %v737
    %914 = vmatpush1.bf16.msra.mxu0 %v736
    %915 = vmatprep.subr.bf16.mxu0 %v740
    %916 = vmatpush1.bf16.msra.mxu0 %v739
    %917 = vmatprep.subr.bf16.mxu0 %v743
    %918 = vmatpush1.bf16.msra.mxu0 %v742
    %919 = vmatprep.subr.bf16.mxu0 %v746
    %920 = vmatpush1.bf16.msra.mxu0 %v745
    %921 = vmatprep.subr.bf16.mxu0 %v749
    %922 = vmatpush1.bf16.msra.mxu0 %v748
    %923 = vmatprep.subr.bf16.mxu0 %v752
    %924 = vmatpush1.bf16.msra.mxu0 %v751
    %925 = vmatprep.subr.bf16.mxu0 %v755
    %926 = vmatpush1.bf16.msra.mxu0 %v754
    %927 = vmatprep.subr.bf16.mxu0 %v758
    %928 = vmatpush1.bf16.msra.mxu0 %v757
    %929 = vmatprep.mubr.bf16.mxu0 %v198
    %930 = vmatmul.mubr.bf16.gmra.mrb[0].mxu0 %v197
    %v931 = vpop.f32.mrb[0].mxu0
    %v932 = vadd.f32 %v891, %v931
    %v933 = vpop.f32.mrb[0].mxu0
    %v934 = vadd.f32 %v893, %v933
    %v935 = vpop.f32.mrb[0].mxu0
    %v936 = vpop.f32.mrb[0].mxu0
    %937 = vdwg.mxu0
    %938 = vmatprep.subr.bf16.mxu0 0
    %939 = vmatpush1.bf16.msra.mxu0 %v666
    %940 = vmatprep.subr.bf16.mxu0 0
    %941 = vmatpush1.bf16.msra.mxu0 %v669
    %942 = vmatprep.subr.bf16.mxu0 0
    %943 = vmatpush1.bf16.msra.mxu0 %v672
    %944 = vmatprep.subr.bf16.mxu0 0
    %945 = vmatpush1.bf16.msra.mxu0 %v675
    %946 = vmatprep.subr.bf16.mxu0 0
    %947 = vmatpush1.bf16.msra.mxu0 %v678
    %948 = vmatprep.subr.bf16.mxu0 0
    %949 = vmatpush1.bf16.msra.mxu0 %v681
    %950 = vmatprep.subr.bf16.mxu0 0
    %951 = vmatpush1.bf16.msra.mxu0 %v684
    %952 = vmatprep.subr.bf16.mxu0 0
    %953 = vmatpush1.bf16.msra.mxu0 %v687
    %954 = vmatprep.subr.bf16.mxu0 0
    %955 = vmatpush1.bf16.msra.mxu0 %v690
    %956 = vmatprep.subr.bf16.mxu0 0
    %957 = vmatpush1.bf16.msra.mxu0 %v693
    %958 = vmatprep.subr.bf16.mxu0 0
    %959 = vmatpush1.bf16.msra.mxu0 %v696
    %960 = vmatprep.subr.bf16.mxu0 0
    %961 = vmatpush1.bf16.msra.mxu0 %v699
    %962 = vmatprep.subr.bf16.mxu0 0
    %963 = vmatpush1.bf16.msra.mxu0 %v702
    %964 = vmatprep.subr.bf16.mxu0 0
    %965 = vmatpush1.bf16.msra.mxu0 %v705
    %966 = vmatprep.subr.bf16.mxu0 0
    %967 = vmatpush1.bf16.msra.mxu0 %v708
    %968 = vmatprep.subr.bf16.mxu0 0
    %969 = vmatpush1.bf16.msra.mxu0 %v711
    %970 = vmatprep.mubr.bf16.mxu0 %v196
    %971 = vmatmul.mubr.bf16.gmra.mrb[0].mxu0 %v195
    %v972 = vpop.f32.mrb[0].mxu0
    %v973 = vadd.f32 %v343, %v972
    %v974 = vpop.f32.mrb[0].mxu0
    %v975 = vpop.f32.mrb[0].mxu0
    %v976 = vpop.f32.mrb[0].mxu0
    %977 = vdwg.mxu0
    %978 = vmatprep.subr.bf16.mxu0 0
    %979 = vmatpush1.bf16.msra.mxu0 %v714
    %980 = vmatprep.subr.bf16.mxu0 0
    %981 = vmatpush1.bf16.msra.mxu0 %v717
    %982 = vmatprep.subr.bf16.mxu0 0
    %983 = vmatpush1.bf16.msra.mxu0 %v720
    %984 = vmatprep.subr.bf16.mxu0 0
    %985 = vmatpush1.bf16.msra.mxu0 %v723
    %986 = vmatprep.subr.bf16.mxu0 0
    %987 = vmatpush1.bf16.msra.mxu0 %v726
    %988 = vmatprep.subr.bf16.mxu0 0
    %989 = vmatpush1.bf16.msra.mxu0 %v729
    %990 = vmatprep.subr.bf16.mxu0 0
    %991 = vmatpush1.bf16.msra.mxu0 %v732
    %992 = vmatprep.subr.bf16.mxu0 0
    %993 = vmatpush1.bf16.msra.mxu0 %v735
    %994 = vmatprep.subr.bf16.mxu0 0
    %995 = vmatpush1.bf16.msra.mxu0 %v738
    %996 = vmatprep.subr.bf16.mxu0 0
    %997 = vmatpush1.bf16.msra.mxu0 %v741
    %998 = vmatprep.subr.bf16.mxu0 0
    %999 = vmatpush1.bf16.msra.mxu0 %v744
    %1000 = vmatprep.subr.bf16.mxu0 0
    %1001 = vmatpush1.bf16.msra.mxu0 %v747
    %1002 = vmatprep.subr.bf16.mxu0 0
    %1003 = vmatpush1.bf16.msra.mxu0 %v750
    %1004 = vmatprep.subr.bf16.mxu0 0
    %1005 = vmatpush1.bf16.msra.mxu0 %v753
    %1006 = vmatprep.subr.bf16.mxu0 0
    %1007 = vmatpush1.bf16.msra.mxu0 %v756
    %1008 = vmatprep.subr.bf16.mxu0 0
    %1009 = vmatpush1.bf16.msra.mxu0 %v759
    %1010 = vmatprep.mubr.bf16.mxu0 %v198
    %1011 = vmatmul.mubr.bf16.gmra.mrb[0].mxu0 %v197
    %v1012 = vpop.f32.mrb[0].mxu0
    %v1013 = vadd.f32 %v973, %v1012
    %v1014 = vpop.f32.mrb[0].mxu0
    %v1015 = vpop.f32.mrb[0].mxu0
    %v1016 = vpop.f32.mrb[0].mxu0
    %1017 = vdwg.mxu0
    %v1018 = vmax.f32 %v932, 0.0
    %v1019 = vmax.f32 %v934, 0.0
    %v1020 = vmax.f32 %v1013, 0.0
    %v1021 = vpack.c.bf16 %v1018, %v1018
    %v1022 = vpack.c.bf16 %v1019, %v1019
    %v1023 = vpack.c.bf16 %v1020, %v1020
    %v1024 = vld [vmem:[%s3] sm:$0xf]
    %v1025 = vld [vmem:[%s3 + $0x4] sm:$0xf]
    %v1026 = vld [vmem:[%s3 + $0x8] sm:$0xf]
    %v1027 = vld [vmem:[%s3 + $0xc] sm:$0xf]
    %v1028 = vld [vmem:[%s3 + $0x10] sm:$0xf]
    %v1029 = vld [vmem:[%s3 + $0x14] sm:$0xf]
    %v1030 = vld [vmem:[%s3 + $0x18] sm:$0xf]
    %v1031 = vld [vmem:[%s3 + $0x1c] sm:$0xf]
    %v1032 = vld [vmem:[%s3 + $0x20] sm:$0xf]
    %v1033 = vld [vmem:[%s3 + $0x24] sm:$0xf]
    %v1034 = vld [vmem:[%s3 + $0x28] sm:$0xf]
    %v1035 = vld [vmem:[%s3 + $0x2c] sm:$0xf]
    %v1036 = vld [vmem:[%s3 + $0x30] sm:$0xf]
    %v1037 = vld [vmem:[%s3 + $0x34] sm:$0xf]
    %v1038 = vld [vmem:[%s3 + $0x38] sm:$0xf]
    %v1039 = vld [vmem:[%s3 + $0x3c] sm:$0xf]
    %v1040 = vld [vmem:[%s3 + $0x40] sm:$0xf]
    %v1041 = vld [vmem:[%s3 + $0x44] sm:$0xf]
    %v1042 = vld [vmem:[%s3 + $0x48] sm:$0xf]
    %v1043 = vld [vmem:[%s3 + $0x4c] sm:$0xf]
    %v1044 = vld [vmem:[%s3 + $0x50] sm:$0xf]
    %v1045 = vld [vmem:[%s3 + $0x54] sm:$0xf]
    %v1046 = vld [vmem:[%s3 + $0x58] sm:$0xf]
    %v1047 = vld [vmem:[%s3 + $0x5c] sm:$0xf]
    %v1048 = vld [vmem:[%s3 + $0x60] sm:$0xf]
    %v1049 = vld [vmem:[%s3 + $0x64] sm:$0xf]
    %v1050 = vld [vmem:[%s3 + $0x68] sm:$0xf]
    %v1051 = vld [vmem:[%s3 + $0x6c] sm:$0xf]
    %v1052 = vld [vmem:[%s3 + $0x70] sm:$0xf]
    %v1053 = vld [vmem:[%s3 + $0x74] sm:$0xf]
    %v1054 = vld [vmem:[%s3 + $0x78] sm:$0xf]
    %v1055 = vld [vmem:[%s3 + $0x7c] sm:$0xf]
    %v1056 = vld [vmem:[%s3 + $0x80] sm:$0xf]
    %v1057 = vld [vmem:[%s3 + $0x84] sm:$0xf]
    %v1058 = vld [vmem:[%s3 + $0x88] sm:$0xf]
    %v1059 = vld [vmem:[%s3 + $0x8c] sm:$0xf]
    %v1060 = vld [vmem:[%s3 + $0x90] sm:$0xf]
    %v1061 = vld [vmem:[%s3 + $0x94] sm:$0xf]
    %v1062 = vld [vmem:[%s3 + $0x98] sm:$0xf]
    %v1063 = vld [vmem:[%s3 + $0x9c] sm:$0xf]
    %v1064 = vld [vmem:[%s3 + $0xa0] sm:$0xf]
    %v1065 = vld [vmem:[%s3 + $0xa4] sm:$0xf]
    %v1066 = vld [vmem:[%s3 + $0xa8] sm:$0xf]
    %v1067 = vld [vmem:[%s3 + $0xac] sm:$0xf]
    %v1068 = vld [vmem:[%s3 + $0xb0] sm:$0xf]
    %v1069 = vld [vmem:[%s3 + $0xb4] sm:$0xf]
    %v1070 = vld [vmem:[%s3 + $0xb8] sm:$0xf]
    %v1071 = vld [vmem:[%s3 + $0xbc] sm:$0xf]
    %v1072 = vld [vmem:[%s3 + $0xc0] sm:$0x1]
    %v1073 = vunpack.c.l.bf16 %v1072
    %v1074 = vlaneseq
    %v1075 = vshrl.u32 %v1074, 7
    %v1076 = vsub.s32 0, %v1075
    %v1077 = vrot.slane %v1073, %v1076
    %v1126 = vunpack.c.l.b16 %v1024
    %v1127 = vunpack.c.l.b16 %v1025
    %v1128 = vunpack.c.l.b16 %v1026
    %v1129 = vunpack.c.l.b16 %v1027
    %v1130 = vunpack.c.l.b16 %v1028
    %v1131 = vunpack.c.l.b16 %v1029
    %v1132 = vunpack.c.l.b16 %v1030
    %v1133 = vunpack.c.l.b16 %v1031
    %v1134 = vunpack.c.l.b16 %v1032
    %v1135 = vunpack.c.l.b16 %v1033
    %v1136 = vunpack.c.l.b16 %v1034
    %v1137 = vunpack.c.l.b16 %v1035
    %v1138 = vunpack.c.l.b16 %v1036
    %v1139 = vunpack.c.l.b16 %v1037
    %v1140 = vunpack.c.l.b16 %v1038
    %v1141 = vunpack.c.l.b16 %v1039
    %v1142 = vunpack.c.l.b16 %v1040
    %v1143 = vunpack.c.l.b16 %v1041
    %v1144 = vunpack.c.l.b16 %v1042
    %v1145 = vunpack.c.l.b16 %v1043
    %v1146 = vunpack.c.l.b16 %v1044
    %v1147 = vunpack.c.l.b16 %v1045
    %v1148 = vunpack.c.l.b16 %v1046
    %v1149 = vunpack.c.l.b16 %v1047
    %v1150 = vunpack.c.l.b16 %v1048
    %v1151 = vunpack.c.l.b16 %v1049
    %v1152 = vunpack.c.l.b16 %v1050
    %v1153 = vunpack.c.l.b16 %v1051
    %v1154 = vunpack.c.l.b16 %v1052
    %v1155 = vunpack.c.l.b16 %v1053
    %v1156 = vunpack.c.l.b16 %v1054
    %v1157 = vunpack.c.l.b16 %v1055
    %v1158 = vunpack.c.l.b16 %v1056
    %v1159 = vunpack.c.l.b16 %v1057
    %v1160 = vunpack.c.l.b16 %v1058
    %v1161 = vunpack.c.l.b16 %v1059
    %v1162 = vunpack.c.l.b16 %v1060
    %v1163 = vunpack.c.l.b16 %v1061
    %v1164 = vunpack.c.l.b16 %v1062
    %v1165 = vunpack.c.l.b16 %v1063
    %v1166 = vunpack.c.l.b16 %v1064
    %v1167 = vunpack.c.l.b16 %v1065
    %v1168 = vunpack.c.l.b16 %v1066
    %v1169 = vunpack.c.l.b16 %v1067
    %v1170 = vunpack.c.l.b16 %v1068
    %v1171 = vunpack.c.l.b16 %v1069
    %v1172 = vunpack.c.l.b16 %v1070
    %v1173 = vunpack.c.l.b16 %v1071
    %v1174 = vpack.c.b16 %v1127, %v1126
    %v1175 = vpack.c.b16 %v1129, %v1128
    %v1176 = vpack.c.b16 %v1131, %v1130
    %v1177 = vpack.c.b16 %v1133, %v1132
    %v1178 = vpack.c.b16 %v1135, %v1134
    %v1179 = vpack.c.b16 %v1137, %v1136
    %v1180 = vpack.c.b16 %v1139, %v1138
    %v1181 = vpack.c.b16 %v1141, %v1140
    %v1182 = vpack.c.b16 %v1143, %v1142
    %v1183 = vpack.c.b16 %v1145, %v1144
    %v1184 = vpack.c.b16 %v1147, %v1146
    %v1185 = vpack.c.b16 %v1149, %v1148
    %v1186 = vpack.c.b16 %v1151, %v1150
    %v1187 = vpack.c.b16 %v1153, %v1152
    %v1188 = vpack.c.b16 %v1155, %v1154
    %v1189 = vpack.c.b16 %v1157, %v1156
    %v1190 = vpack.c.b16 %v1159, %v1158
    %v1191 = vpack.c.b16 %v1161, %v1160
    %v1192 = vpack.c.b16 %v1163, %v1162
    %v1193 = vpack.c.b16 %v1165, %v1164
    %v1194 = vpack.c.b16 %v1167, %v1166
    %v1195 = vpack.c.b16 %v1169, %v1168
    %v1196 = vpack.c.b16 %v1171, %v1170
    %v1197 = vpack.c.b16 %v1173, %v1172
    %1222 = vmatprep.subr.bf16.mxu0 0
    %1223 = vmatpush1.bf16.msra.mxu0 %v1174
    %1224 = vmatprep.subr.bf16.mxu0 0
    %1225 = vmatpush1.bf16.msra.mxu0 %v1175
    %1226 = vmatprep.subr.bf16.mxu0 0
    %1227 = vmatpush1.bf16.msra.mxu0 %v1176
    %1228 = vmatprep.subr.bf16.mxu0 0
    %1229 = vmatpush1.bf16.msra.mxu0 %v1177
    %1230 = vmatprep.subr.bf16.mxu0 0
    %1231 = vmatpush1.bf16.msra.mxu0 %v1178
    %1232 = vmatprep.subr.bf16.mxu0 0
    %1233 = vmatpush1.bf16.msra.mxu0 %v1179
    %1234 = vmatprep.subr.bf16.mxu0 0
    %1235 = vmatpush1.bf16.msra.mxu0 %v1180
    %1236 = vmatprep.subr.bf16.mxu0 0
    %1237 = vmatpush1.bf16.msra.mxu0 %v1181
    %1238 = vmatprep.subr.bf16.mxu0 0
    %1239 = vmatpush1.bf16.msra.mxu0 %v1182
    %1240 = vmatprep.subr.bf16.mxu0 0
    %1241 = vmatpush1.bf16.msra.mxu0 %v1183
    %1242 = vmatprep.subr.bf16.mxu0 0
    %1243 = vmatpush1.bf16.msra.mxu0 %v1184
    %1244 = vmatprep.subr.bf16.mxu0 0
    %1245 = vmatpush1.bf16.msra.mxu0 %v1185
    %1246 = vmatprep.subr.bf16.mxu0 0
    %1247 = vmatpush1.bf16.msra.mxu0 %v1186
    %1248 = vmatprep.subr.bf16.mxu0 0
    %1249 = vmatpush1.bf16.msra.mxu0 %v1187
    %1250 = vmatprep.subr.bf16.mxu0 0
    %1251 = vmatpush1.bf16.msra.mxu0 %v1188
    %1252 = vmatprep.subr.bf16.mxu0 0
    %1253 = vmatpush1.bf16.msra.mxu0 %v1189
    %1254 = vmatprep.mubr.bf16.mxu0 %v1022
    %1255 = vmatmul.mubr.bf16.gmra.mrb[0].mxu0 %v1021
    %v1256 = vpop.f32.mrb[0].mxu0
    %v1257 = vadd.f32 %v1077, %v1256
    %v1258 = vpop.f32.mrb[0].mxu0
    %v1259 = vpop.f32.mrb[0].mxu0
    %v1260 = vpop.f32.mrb[0].mxu0
    %1261 = vdwg.mxu0
    %1262 = vmatprep.subr.bf16.mxu0 0
    %1263 = vmatpush1.bf16.msra.mxu0 %v1190
    %1264 = vmatprep.subr.bf16.mxu0 0
    %1265 = vmatpush1.bf16.msra.mxu0 %v1191
    %1266 = vmatprep.subr.bf16.mxu0 0
    %1267 = vmatpush1.bf16.msra.mxu0 %v1192
    %1268 = vmatprep.subr.bf16.mxu0 0
    %1269 = vmatpush1.bf16.msra.mxu0 %v1193
    %1270 = vmatprep.subr.bf16.mxu0 0
    %1271 = vmatpush1.bf16.msra.mxu0 %v1194
    %1272 = vmatprep.subr.bf16.mxu0 0
    %1273 = vmatpush1.bf16.msra.mxu0 %v1195
    %1274 = vmatprep.subr.bf16.mxu0 0
    %1275 = vmatpush1.bf16.msra.mxu0 %v1196
    %1276 = vmatprep.subr.bf16.mxu0 0
    %1277 = vmatpush1.bf16.msra.mxu0 %v1197
    %1278 = vmatprep.subr.bf16.mxu0 0
    %1279 = vmatpush1.bf16.msra.mxu0 0
    %1280 = vmatprep.subr.bf16.mxu0 0
    %1281 = vmatpush1.bf16.msra.mxu0 0
    %1282 = vmatprep.subr.bf16.mxu0 0
    %1283 = vmatpush1.bf16.msra.mxu0 0
    %1284 = vmatprep.subr.bf16.mxu0 0
    %1285 = vmatpush1.bf16.msra.mxu0 0
    %1286 = vmatprep.subr.bf16.mxu0 0
    %1287 = vmatpush1.bf16.msra.mxu0 0
    %1288 = vmatprep.subr.bf16.mxu0 0
    %1289 = vmatpush1.bf16.msra.mxu0 0
    %1290 = vmatprep.subr.bf16.mxu0 0
    %1291 = vmatpush1.bf16.msra.mxu0 0
    %1292 = vmatprep.subr.bf16.mxu0 0
    %1293 = vmatpush1.bf16.msra.mxu0 0
    %1294 = vmatprep.mubr.bf16.mxu0 0
    %1295 = vmatmul.mubr.bf16.gmra.mrb[0].mxu0 %v1023
    %v1296 = vpop.f32.mrb[0].mxu0
    %v1297 = vadd.f32 %v1257, %v1296
    %v1298 = vpop.f32.mrb[0].mxu0
    %v1299 = vpop.f32.mrb[0].mxu0
    %v1300 = vpop.f32.mrb[0].mxu0
    %1301 = vdwg.mxu0
    %v1302 = vmul.f32 %v1297, 0.5
    %v1303 = vtanh.pop %v1302
    %v1304 = vmul.f32 %v1303, 0.5
    %v1305 = vadd.f32 %v1304, 0.5
    %vm1306 = vcmask 58368
    %1307 = vst.msk [vmem:[#allocation5] sm:$0x3] %vm1306, %v1305
    // Predicated region
    $region22: #{tpu_custom_call.1} parent=1 // pred_check
      _
    $region23: #{tpu_custom_call.1} parent=1 // pred_check_branch
      %1309 = sbr.rel (0) target = $region25
    $region24: #{tpu_custom_call.1} parent=1 // pred_region
      %s1311 = ssub.s32 32, 32
      %1312 = vsyncadd [#allocation4], %s1311
      %s1314 = sshll.u32 [#allocation5], 4
      %s1315 = int_to_ptr.vmem [resolvable:$true] %s1314
      %1317 = dma.vmem_to_hbm [thread:$0]  %s1315, 32, %s4, [#allocation4]
    $region25: #{tpu_custom_call.1} parent=1 // pred_fallthru
      _
    // Predicated region
    $region26: #{tpu_custom_call.1} parent=1 // pred_check
      _
    $region27: #{tpu_custom_call.1} parent=1 // pred_check_branch
      %1319 = sbr.rel (0) target = $region29
    $region28: #{tpu_custom_call.1} parent=1 // pred_region
      %1320 = dma.done [#allocation4], 32
    $region29: #{tpu_custom_call.1} parent=1 // pred_fallthru
      _
    %1321 = vsyncpa [#allocation3], 1
    %1322 = vsyncpa [#allocation4], 1

</llo_original>
